<compile_context>
chip_gen: v6e
topology: v6e:2x2x1
jax: 0.10.0
libtpu: 0.0.40
codegen_flags: <defaults>
</compile_context>

<pallas_src>
import jax
import jax.numpy as jnp
from jax.experimental import pallas as pl
from jax.experimental.pallas import tpu as pltpu


def _pick_row_tile(n_rows, row_bytes, target_bytes=4 << 20):
    """Largest row tile that divides n_rows, keeps the block <= ~target_bytes,
    and keeps the second-minor block dim 8-aligned (or equal to the full dim)."""
    cap = max(1, min(n_rows, target_bytes // max(row_bytes, 1)))
    for t in range(cap, 0, -1):
        if n_rows % t == 0 and (t % 8 == 0 or t == n_rows):
            return t
    for t in range(min(n_rows, 8), cap, -1):  # slightly over budget but aligned
        if n_rows % t == 0 and t % 8 == 0:
            return t
    # TODO(synk): also tile the lane (H*W) axis for extremely large spatial maps.
    return n_rows


def _make_tv_pool_kernel(img_w):
    """TV + adaptive-avg-pool over a (rows, H*W) slab (one row per (b, c)).

    For flattened spatial index p = h*W + w:
      roll by HW-1 -> x[p+1]  (right neighbour, horizontal diff f-g)
      roll by HW-W -> x[p+W]  (below neighbour, vertical   diff f-h)
    weight_ref holds 1/((H-1)(W-1)) on interior pixels (h < H-1, w < W-1) and 0
    elsewhere, so the weighted sum equals the mean of the (H-1, W-1) TV map and
    the wrap-around elements of the rolls are zeroed out.
    """
    def kernel(x_ref, weight_ref, o_ref):
        x = x_ref[...].astype(jnp.float32)               # (tr, HW)
        hw = x.shape[-1]
        right = pltpu.roll(x, shift=hw - 1, axis=1)      # x[:, (p+1) % HW]
        below = pltpu.roll(x, shift=hw - img_w, axis=1)  # x[:, (p+W) % HW]
        dg = x - right
        dh = x - below
        tv = (dg * dg + dh * dh) * weight_ref[...]       # (1, HW) broadcast
        o_ref[...] = jnp.sum(tv, axis=1, keepdims=True)  # (tr, 1) pooled mean
    return kernel


def _fc_kernel(p_ref, w1_ref, b1_ref, w2_ref, b2_ref, s_ref):
    """fc: Linear(C->R) + ReLU + Linear(R->C) + Sigmoid on the pooled (B, C)."""
    h = jnp.dot(p_ref[...], w1_ref[...], preferred_element_type=jnp.float32) + b1_ref[...]
    h = jnp.maximum(h, 0.0)
    s = jnp.dot(h, w2_ref[...], preferred_element_type=jnp.float32) + b2_ref[...]
    s_ref[...] = jax.nn.sigmoid(s)


def _gate_kernel(x_ref, s_ref, o_ref):
    # (tr, HW) * (tr, 1): per-(b,c) scale broadcast along the lane-dense axis.
    o_ref[...] = x_ref[...] * s_ref[...]


def se_tv_layer(x_nchw, w1, b1, w2, b2):
    """x_nchw: (B, C, H, W). w1: (C, R), b1: (1, R), w2: (R, C), b2: (1, C).
    FC weights are stored pre-transposed (w1 = W_fc1.T, w2 = W_fc2.T)."""
    B, C, H, W = x_nchw.shape
    BC, HW = B * C, H * W
    x2 = x_nchw.reshape(BC, HW)          # free: NCHW is row-major contiguous

    itemsize = jnp.dtype(x2.dtype).itemsize
    tr = _pick_row_tile(BC, HW * itemsize)
    grid = (BC // tr,)
    blk_bytes = tr * HW * itemsize
    vmem_limit = int(min(max(6 * blk_bytes + (2 << 20), 16 << 20), 64 << 20))
    cparams = pltpu.CompilerParams(
        dimension_semantics=("parallel",),
        vmem_limit_bytes=vmem_limit,
    )

    # Interior-pixel weights: 1/((H-1)(W-1)) where h < H-1 and w < W-1, else 0.
    interior = (jnp.arange(H) < H - 1)[:, None] & (jnp.arange(W) < W - 1)[None, :]
    weight = (interior.astype(jnp.float32) / ((H - 1) * (W - 1))).reshape(1, HW)

    # Pass 1: per-(b, c) mean of the TV map -> (B*C, 1).
    pooled = pl.pallas_call(
        _make_tv_pool_kernel(W),
        out_shape=jax.ShapeDtypeStruct((BC, 1), jnp.float32),
        grid_spec=pltpu.PrefetchScalarGridSpec(
            num_scalar_prefetch=0,
            grid=grid,
            in_specs=[
                pl.BlockSpec((tr, HW), lambda i: (i, 0)),
                pl.BlockSpec((1, HW), lambda i: (0, 0)),
            ],
            out_specs=pl.BlockSpec((tr, 1), lambda i: (i, 0)),
        ),
        compiler_params=cparams,
    )(x2, weight)

    # Tiny FC: runs once per call (hoisted out of the streaming grid).
    scale = pl.pallas_call(
        _fc_kernel,
        out_shape=jax.ShapeDtypeStruct((B, C), jnp.float32),
    )(pooled.reshape(B, C), w1, b1, w2, b2)

    # Pass 2: channel-wise gating of the ORIGINAL x with lane-dense stores.
    out2 = pl.pallas_call(
        _gate_kernel,
        out_shape=jax.ShapeDtypeStruct((BC, HW), x2.dtype),
        grid_spec=pltpu.PrefetchScalarGridSpec(
            num_scalar_prefetch=0,
            grid=grid,
            in_specs=[
                pl.BlockSpec((tr, HW), lambda i: (i, 0)),
                pl.BlockSpec((tr, 1), lambda i: (i, 0)),
            ],
            out_specs=pl.BlockSpec((tr, HW), lambda i: (i, 0)),
        ),
        compiler_params=cparams,
    )(x2, scale.reshape(BC, 1).astype(x2.dtype))

    return out2.reshape(B, C, H, W)


def se_tv_ref(x, w1, b1, w2, b2):
    """Pure-JAX reference mirroring the PyTorch forward (NCHW)."""
    f = x[:, :, :-1, :-1]
    g = x[:, :, :-1, 1:]
    h = x[:, :, 1:, :-1]
    tv = (f - g) ** 2 + (f - h) ** 2
    y = jnp.mean(tv, axis=(2, 3))                  # (B, C)
    y = jnp.maximum(y @ w1 + b1[0], 0.0)
    y = jax.nn.sigmoid(y @ w2 + b2[0])
    return x * y[:, :, None, None]


if __name__ == "__main__":
    B, C, H, W = 2, 4, 16, 16
    R = 64  # reduction

    key = jax.random.PRNGKey(0)
    kx, k1, k2, k3, k4 = jax.random.split(key, 5)

    x = jax.random.normal(kx, (B, C, H, W), dtype=jnp.float32)
    # fc = Linear(C,R) -> ReLU -> Linear(R,C) -> Sigmoid, weights pre-transposed.
    w1 = jax.random.normal(k1, (C, R), dtype=jnp.float32) * 0.1
    b1 = jax.random.normal(k2, (1, R), dtype=jnp.float32) * 0.1
    w2 = jax.random.normal(k3, (R, C), dtype=jnp.float32) * 0.1
    b2 = jax.random.normal(k4, (1, C), dtype=jnp.float32) * 0.1

    out = jax.block_until_ready(se_tv_layer(x, w1, b1, w2, b2))
    ref = jax.block_until_ready(se_tv_ref(x, w1, b1, w2, b2))

    assert out.shape == (B, C, H, W)
    assert jnp.allclose(out, ref, atol=1e-5, rtol=1e-5), "mismatch vs JAX reference"
    print("KERNEL_OK")
</pallas_src>

<mosaic_0001>
module attributes {stable_mosaic.version = 11 : i64} {
  func.func @kernel(%arg0: i32, %arg1: memref<8x256xf32, #tpu.memory_space<vmem>>, %arg2: memref<1x256xf32, #tpu.memory_space<vmem>>, %arg3: memref<8x1xf32, #tpu.memory_space<vmem>>) attributes {dimension_semantics = [#tpu.dimension_semantics<parallel>], iteration_bounds = array<i64: 1>, scalar_prefetch = 0 : i64, scratch_operands = 0 : i64, tpu.core_type = #tpu.core_type<tc>, window_params = [{transform_indices = @transform_0, window_bounds = array<i64: 8, 256>}, {pipeline_mode = #tpu.pipeline_mode<synchronous>, transform_indices = @transform_1, window_bounds = array<i64: 1, 256>}, {transform_indices = @transform_2, window_bounds = array<i64: 8, 1>}]} {
    %c0 = arith.constant 0 : index
    %c0_0 = arith.constant 0 : index
    %0 = vector.load %arg1[%c0, %c0_0] : memref<8x256xf32, #tpu.memory_space<vmem>>, vector<8x256xf32>
    %c255_i32 = arith.constant 255 : i32
    %1 = tpu.dynamic_rotate %0 by %c255_i32 dim 1 : vector<8x256xf32>, i32 -> vector<8x256xf32>
    %c240_i32 = arith.constant 240 : i32
    %2 = tpu.dynamic_rotate %0 by %c240_i32 dim 1 : vector<8x256xf32>, i32 -> vector<8x256xf32>
    %3 = arith.subf %0, %1 : vector<8x256xf32>
    %4 = arith.subf %0, %2 : vector<8x256xf32>
    %5 = arith.mulf %3, %3 : vector<8x256xf32>
    %6 = arith.mulf %4, %4 : vector<8x256xf32>
    %7 = arith.addf %5, %6 : vector<8x256xf32>
    %c0_1 = arith.constant 0 : index
    %c0_2 = arith.constant 0 : index
    %8 = vector.load %arg2[%c0_1, %c0_2] : memref<1x256xf32, #tpu.memory_space<vmem>>, vector<1x256xf32>
    %9 = vector.broadcast %8 : vector<1x256xf32> to vector<8x256xf32>
    %10 = arith.mulf %7, %9 : vector<8x256xf32>
    %cst = arith.constant dense<0.000000e+00> : vector<8xf32>
    %11 = vector.multi_reduction <add>, %10, %cst [1] : vector<8x256xf32> to vector<8xf32>
    %12 = vector.shape_cast %11 : vector<8xf32> to vector<8x1xf32>
    %c0_3 = arith.constant 0 : index
    %c0_4 = arith.constant 0 : index
    %13 = vector.load %arg3[%c0_3, %c0_4] : memref<8x1xf32, #tpu.memory_space<vmem>>, vector<8x1xf32>
    tpu.vector_store %arg3[%c0_3, %c0_4], %12 {strides = array<i32>} : memref<8x1xf32, #tpu.memory_space<vmem>>, vector<8x1xf32>,
    return
  }
  func.func @transform_0(%arg0: i32) -> (i32, i32) {
    %c0_i32 = arith.constant 0 : i32
    %c0_i32_0 = arith.constant 0 : i32
    return %arg0, %c0_i32 : i32, i32
  }
  func.func @transform_1(%arg0: i32) -> (i32, i32) {
    %c0_i32 = arith.constant 0 : i32
    %c0_i32_0 = arith.constant 0 : i32
    %c0_i32_1 = arith.constant 0 : i32
    return %c0_i32, %c0_i32_0 : i32, i32
  }
  func.func @transform_2(%arg0: i32) -> (i32, i32) {
    %c0_i32 = arith.constant 0 : i32
    %c0_i32_0 = arith.constant 0 : i32
    return %arg0, %c0_i32 : i32, i32
  }
}

</mosaic_0001>

<llo_original>
// kernel: tpu_custom_call.1
$region0: #{tpu_custom_call.1}
  #allocation0 [shape = 'u32[]', space=smem, size = 0x4, offset = 0x4, fixed_abs, tag = 'smem constant byte address 0x4 - core index']
  #allocation1 [shape = 'u32[144,128]{1,0:T(1,128)}', space=vmem, size = 0x12000, scoped, tag = 'internal scratch']
  %s0 = inlined_call_operand.hbm [shape: f32[8,256], index: 0, kind: input, shape index: {}]
  %s1 = inlined_call_operand.hbm [shape: f32[1,256], index: 1, kind: input, shape index: {}]
  %s2 = inlined_call_operand.vmem [shape: f32[8,1], index: 2, kind: output, shape index: {}]
  %s3 = sld [smem:[#allocation0]]
  $region26: #{tpu_custom_call.1} parent=0
    _
  %s5 = ssub.s32 1, %s3
  %s6 = scalar_select 0, %s5, %s3
  $region1: #{tpu_custom_call.1} parent=0
    #allocation2 [shape = 'u8[8192]{0}', space=vmem, size = 0x2000, scoped, tag = 'input window, operand 0, single buffered']
    #allocation3 [shape = 's32[1]{0}', space=sflag, size = 0x4, scoped, tag = 'scoped memory for tpu_custom_call.1']
    #allocation4 [shape = 'u8[1024]{0}', space=vmem, size = 0x400, scoped, tag = 'input window, operand 1, single buffered']
    #allocation5 [shape = 's32[1]{0}', space=sflag, size = 0x4, scoped, tag = 'scoped memory for tpu_custom_call.1']
    %7 = vsyncpa [#allocation3], 0
    %8 = vsyncpa [#allocation5], 0
    // Predicated region
    $region2: #{tpu_custom_call.1} parent=1 // pred_check
      _
    $region3: #{tpu_custom_call.1} parent=1 // pred_check_branch
      %10 = sbr.rel (0) target = $region5
    $region4: #{tpu_custom_call.1} parent=1 // pred_region
      %s12 = ssub.s32 256, 256
      %13 = vsyncadd [#allocation3], %s12
      %s15 = sshll.u32 [#allocation2], 4
      %s16 = int_to_ptr.vmem [resolvable:$true] %s15
      %18 = dma.hbm_to_vmem [thread:$0]  %s0, 256, %s16, [#allocation3]
    $region5: #{tpu_custom_call.1} parent=1 // pred_fallthru
      _
    // Predicated region
    $region6: #{tpu_custom_call.1} parent=1 // pred_check
      _
    $region7: #{tpu_custom_call.1} parent=1 // pred_check_branch
      %20 = sbr.rel (0) target = $region9
    $region8: #{tpu_custom_call.1} parent=1 // pred_region
      %s22 = ssub.s32 32, 32
      %23 = vsyncadd [#allocation5], %s22
      %s25 = sshll.u32 [#allocation4], 4
      %s26 = int_to_ptr.vmem [resolvable:$true] %s25
      %28 = dma.hbm_to_vmem [thread:$0]  %s1, 32, %s26, [#allocation5]
    $region9: #{tpu_custom_call.1} parent=1 // pred_fallthru
      _
    // Predicated region
    $region10: #{tpu_custom_call.1} parent=1 // pred_check
      _
    $region11: #{tpu_custom_call.1} parent=1 // pred_check_branch
      %30 = sbr.rel (0) target = $region13
    $region12: #{tpu_custom_call.1} parent=1 // pred_region
      %31 = dma.done [#allocation3], 256
    $region13: #{tpu_custom_call.1} parent=1 // pred_fallthru
      _
    // Predicated region
    $region14: #{tpu_custom_call.1} parent=1 // pred_check
      _
    $region15: #{tpu_custom_call.1} parent=1 // pred_check_branch
      %33 = sbr.rel (0) target = $region17
    $region16: #{tpu_custom_call.1} parent=1 // pred_region
      %34 = dma.done [#allocation5], 32
    $region17: #{tpu_custom_call.1} parent=1 // pred_fallthru
      _
    %v35 = vld [vmem:[#allocation2] sm:$0xff]
    %v36 = vld [vmem:[#allocation2 + $0x8] sm:$0xff]
    %37 = vrot.lane.b32.xlu0 %v35, 127
    %v38 = vpop.permute.xlu0 %37
    %39 = vrot.lane.b32.xlu0 %v36, 127
    %v40 = vpop.permute.xlu0 %39
    %v41 = vlaneseq
    %v42 = vand.u32 %v41, 127
    %vm43 = vcmp.lt.s32.totalorder %v42, 127
    %v44 = vsel %vm43, %v38, %v40
    %v45 = vsel %vm43, %v40, %v38
    %46 = vrot.lane.b32.xlu0 %v35, 112
    %v47 = vpop.permute.xlu0 %46
    %48 = vrot.lane.b32.xlu0 %v36, 112
    %v49 = vpop.permute.xlu0 %48
    %vm50 = vcmp.lt.s32.totalorder %v42, 112
    %v51 = vsel %vm50, %v47, %v49
    %v52 = vsel %vm50, %v49, %v47
    %v53 = vsub.f32 %v35, %v44
    %v54 = vsub.f32 %v36, %v45
    %v55 = vsub.f32 %v35, %v51
    %v56 = vsub.f32 %v36, %v52
    %v57 = vmul.f32 %v53, %v53
    %v58 = vmul.f32 %v54, %v54
    %v59 = vmul.f32 %v55, %v55
    %v60 = vmul.f32 %v56, %v56
    %v61 = vadd.f32 %v57, %v59
    %v62 = vadd.f32 %v58, %v60
    %v63 = vld [vmem:[#allocation4] sm:$0x3]
    %v65 = vlaneseq
    %v66 = vshrl.u32 %v65, 7
    %v67 = vsub.s32 0, %v66
    %v68 = vrot.slane %v63, %v67
    %v69 = vlaneseq
    %v70 = vshrl.u32 %v69, 7
    %v71 = vsub.s32 1, %v70
    %v72 = vrot.slane %v63, %v71
    %v75 = vmul.f32 %v61, %v68
    %v76 = vmul.f32 %v62, %v72
    %v77 = vadd.f32 %v75, %v76
    %78 = vadd.xlane.f32.xlu0 %v77
    %v79 = vpop.xlane.xlu0 %78
    %vm80 = vcmask 7168
    %81 = vst.msk [vmem:[%s2] sm:$0xff] %vm80, %v79
    // Predicated region
    $region18: #{tpu_custom_call.1} parent=1 // pred_check
      _
    $region19: #{tpu_custom_call.1} parent=1 // pred_check_branch
      %83 = sbr.rel (0) target = $region21
    $region20: #{tpu_custom_call.1} parent=1 // pred_region
      _
    $region21: #{tpu_custom_call.1} parent=1 // pred_fallthru
      _
    // Predicated region
    $region22: #{tpu_custom_call.1} parent=1 // pred_check
      _
    $region23: #{tpu_custom_call.1} parent=1 // pred_check_branch
      %85 = sbr.rel (0) target = $region25
    $region24: #{tpu_custom_call.1} parent=1 // pred_region
      _
    $region25: #{tpu_custom_call.1} parent=1 // pred_fallthru
      _
    %86 = vsyncpa [#allocation3], 1
    %87 = vsyncpa [#allocation5], 1

</llo_original>
